<compile_context>
chip_gen: v7x
topology: tpu7x:2x2x1
jax: 0.10.0
libtpu: 0.0.40
codegen_flags: <defaults>
</compile_context>

<pallas_src>
import functools

import jax
import jax.numpy as jnp
from jax import lax
from jax.experimental import pallas as pl
from jax.experimental.pallas import tpu as pltpu


def _round_up(a, m):
    return ((a + m - 1) // m) * m


def _choose_batch_tile(batch, tb_cap):
    """Pick (TB, B_pad): TB multiple of 128, B_pad = n_tiles * TB >= batch."""
    b128 = _round_up(batch, 128)
    if b128 <= tb_cap:
        # Small/medium batch: one grid step, except split in two once tiles are
        # big enough that v7x's two TensorCores should both be kept busy.
        n_tiles = 2 if b128 >= 2048 else 1
    else:
        n_tiles = pl.cdiv(b128, tb_cap)
        if n_tiles > 1 and n_tiles % 2 == 1:
            n_tiles += 1                      # keep v7x's 2 TCs balanced
    tb = _round_up(pl.cdiv(b128, n_tiles), 128)
    n_tiles = pl.cdiv(b128, tb)
    return tb, n_tiles * tb


def _mlp_kernel(n_hidden, x_ref, *refs):
    """Whole MLP on one batch tile.

    x_ref : (TB, d0)   batch rows in natural layout
    refs  : (w_0, b_0, ..., w_{n_hidden-1}, b_{n_hidden-1}, w_red, b_red, o_ref)
      w_i   : (d_out, d_in)   PyTorch Linear weight layout (hidden layers)
      b_i   : (d_out, 1)
      w_red : (d_last_in, 1) if n_hidden >= 1 else (1, d0)   mean-folded last layer
      b_red : (1, 1)
      o_ref : (1, TB)         lane-dense per-tile output
    """
    o_ref = refs[-1]
    x = x_ref[...].astype(jnp.float32)                          # (TB, d0)

    if n_hidden == 0:
        # Single Linear + mean(dim=1), fully folded: (1, d0) x (TB, d0)^T -> (1, TB).
        w_red = refs[0][...]
        b_red = refs[1][...]
        o_ref[...] = lax.dot_general(
            w_red, x, (((1,), (1,)), ((), ())),
            preferred_element_type=jnp.float32) + b_red
        return

    # Layer 0: contract the feature axis of both operands -> (d1, TB).
    # Batch lands on the MXU's wide N/lane axis with no wrapper-side transpose.
    w0 = refs[0][...]                                           # (d1, d0)
    b0 = refs[1][...]                                           # (d1, 1)
    h = lax.dot_general(w0, x, (((1,), (1,)), ((), ())),
                        preferred_element_type=jnp.float32) + b0
    # nn.Dropout(p=0.3): identity in eval mode.
    # TODO(synk): training-mode dropout (prng mask + 1/(1-p) scaling) not emitted.
    h = 0.5 * jnp.tanh(0.5 * h) + 0.5                           # sigmoid, one EUP op

    for i in range(1, n_hidden):
        w = refs[2 * i][...]                                    # (d_out, d_in)
        b = refs[2 * i + 1][...]                                # (d_out, 1)
        h = jnp.dot(w, h, preferred_element_type=jnp.float32) + b
        h = 0.5 * jnp.tanh(0.5 * h) + 0.5

    w_red = refs[2 * n_hidden][...]                             # (d_in, 1)
    b_red = refs[2 * n_hidden + 1][...]                         # (1, 1)
    # Final Linear + mean(dim=1), folded; exact f32 VPU multiply + sublane reduce,
    # lane-dense (1, TB) store.
    o_ref[...] = jnp.sum(h * w_red, axis=0, keepdims=True) + b_red


@functools.partial(jax.jit, static_argnames=("tb_cap",))
def mlp_forward(x, weights, biases, *, tb_cap=8192):
    """x: (B, d0) f32; weights[i]: (d_{i+1}, d_i) (PyTorch layout); biases[i]: (d_{i+1},)."""
    B, d0 = x.shape
    n_hidden = len(weights) - 1

    TB, B_pad = _choose_batch_tile(B, tb_cap)
    n_tiles = B_pad // TB

    x = x.astype(jnp.float32)
    if B_pad != B:
        # < TB rows of zero pad; fuses into a single copy under jit. Padded rows
        # are computed then sliced off (no cross-lane contamination).
        x = jnp.pad(x, ((0, B_pad - B), (0, 0)))

    inputs = [x]
    in_specs = [pl.BlockSpec((TB, d0), lambda i: (i, 0))]       # streamed per batch tile
    for li in range(n_hidden):
        w = weights[li].astype(jnp.float32)                     # (d_out, d_in)
        b = biases[li].astype(jnp.float32).reshape(-1, 1)       # (d_out, 1)
        inputs += [w, b]
        # Constant index_map -> weights/biases stay VMEM-resident across the grid.
        in_specs += [pl.BlockSpec(w.shape, lambda i: (0, 0)),
                     pl.BlockSpec(b.shape, lambda i: (0, 0))]

    # Fold the trailing mean(dim=1) into the last Linear (exact).
    w_last = weights[-1].astype(jnp.float32)                    # (d_out, d_in)
    b_last = biases[-1].astype(jnp.float32)
    if n_hidden == 0:
        w_red = w_last.mean(axis=0).reshape(1, -1)              # (1, d0)
    else:
        w_red = w_last.mean(axis=0).reshape(-1, 1)              # (d_last_in, 1)
    b_red = b_last.mean().reshape(1, 1)                         # (1, 1)
    inputs += [w_red, b_red]
    in_specs += [pl.BlockSpec(w_red.shape, lambda i: (0, 0)),
                 pl.BlockSpec(b_red.shape, lambda i: (0, 0))]

    dims = [d0] + [w.shape[0] for w in weights]
    flops = 2 * B_pad * sum(dims[i] * dims[i + 1] for i in range(n_hidden))
    flops += 2 * B_pad * dims[-2]                               # folded mean mat-vec
    transcendentals = B_pad * sum(dims[1:-1])                   # one tanh per hidden unit
    bytes_accessed = 4 * (x.size
                          + sum(w.size + b.size for w, b in zip(weights, biases))
                          + B_pad)

    out = pl.pallas_call(
        functools.partial(_mlp_kernel, n_hidden),
        out_shape=jax.ShapeDtypeStruct((1, B_pad), jnp.float32),
        grid_spec=pltpu.PrefetchScalarGridSpec(
            num_scalar_prefetch=0,
            grid=(n_tiles,),
            in_specs=in_specs,
            out_specs=pl.BlockSpec((1, TB), lambda i: (0, i)),
        ),
        compiler_params=pltpu.CompilerParams(
            # Batch tiles are independent: v7x shards them over its 2 TCs
            # (no-op on v5e/v6e). TB cap of 8192 keeps the double-buffered x tile
            # (~8 MiB) well under the default scoped-VMEM limit on all generations.
            dimension_semantics=("parallel",),
        ),
        cost_estimate=pl.CostEstimate(
            flops=int(flops),
            transcendentals=int(transcendentals),
            bytes_accessed=int(bytes_accessed),
        ),
    )(*inputs)
    return out[0, :B]                                           # (B,)


def reference_forward(x, weights, biases):
    h = x.astype(jnp.float32)
    n = len(weights)
    for i, (w, b) in enumerate(zip(weights, biases)):
        h = h @ w.T + b                                         # PyTorch nn.Linear
        if i != n - 1:
            h = jax.nn.sigmoid(h)
    return jnp.mean(h, axis=1)


def _make_params(key, dims):
    keys = jax.random.split(key, 2 * (len(dims) - 1))
    weights, biases = [], []
    for i in range(1, len(dims)):
        d_in, d_out = dims[i - 1], dims[i]
        bound = 1.0 / (d_in ** 0.5)                             # nn.Linear default init range
        w = jax.random.uniform(keys[2 * (i - 1)], (d_out, d_in),
                               minval=-bound, maxval=bound, dtype=jnp.float32)
        b = jax.random.uniform(keys[2 * (i - 1) + 1], (d_out,),
                               minval=-bound, maxval=bound, dtype=jnp.float32)
        weights.append(w)
        biases.append(b)
    return weights, biases


if __name__ == "__main__":
    dims = [16, 32, 32, 8]
    key = jax.random.PRNGKey(0)
    kx1, kx2, kp = jax.random.split(key, 3)
    weights, biases = _make_params(kp, dims)

    # Case 1: small batch -> a single grid step (TB = round_up(300, 128) = 384).
    x_small = jax.random.normal(kx1, (300, dims[0]), dtype=jnp.float32)
    out_small = jax.block_until_ready(mlp_forward(x_small, weights, biases))
    ref_small = reference_forward(x_small, weights, biases)
    assert out_small.shape == (300,), out_small.shape
    err_small = float(jnp.max(jnp.abs(out_small - ref_small)))
    assert jnp.allclose(out_small, ref_small, atol=1e-3, rtol=1e-3), err_small

    # Case 2: larger batch -> 2 batch tiles (TB = 1280), exercises streaming,
    # padding, and keeps both v7x TensorCores busy.
    x_large = jax.random.normal(kx2, (2500, dims[0]), dtype=jnp.float32)
    out_large = jax.block_until_ready(mlp_forward(x_large, weights, biases))
    ref_large = reference_forward(x_large, weights, biases)
    assert out_large.shape == (2500,), out_large.shape
    err_large = float(jnp.max(jnp.abs(out_large - ref_large)))
    assert jnp.allclose(out_large, ref_large, atol=1e-3, rtol=1e-3), err_large

    print("KERNEL_OK")
</pallas_src>

<mosaic_0001>
module attributes {stable_mosaic.version = 11 : i64} {
  func.func @_mlp_kernel(%arg0: i32, %arg1: memref<384x16xf32, #tpu.memory_space<vmem>>, %arg2: memref<32x16xf32, #tpu.memory_space<vmem>>, %arg3: memref<32x1xf32, #tpu.memory_space<vmem>>, %arg4: memref<32x32xf32, #tpu.memory_space<vmem>>, %arg5: memref<32x1xf32, #tpu.memory_space<vmem>>, %arg6: memref<32x1xf32, #tpu.memory_space<vmem>>, %arg7: memref<1x1xf32, #tpu.memory_space<vmem>>, %arg8: memref<1x384xf32, #tpu.memory_space<vmem>>) attributes {dimension_semantics = [#tpu.dimension_semantics<parallel>], iteration_bounds = array<i64: 1>, scalar_prefetch = 0 : i64, scratch_operands = 0 : i64, tpu.core_type = #tpu.core_type<tc>, window_params = [{transform_indices = @transform_0, window_bounds = array<i64: 384, 16>}, {pipeline_mode = #tpu.pipeline_mode<synchronous>, transform_indices = @transform_1, window_bounds = array<i64: 32, 16>}, {pipeline_mode = #tpu.pipeline_mode<synchronous>, transform_indices = @transform_2, window_bounds = array<i64: 32, 1>}, {pipeline_mode = #tpu.pipeline_mode<synchronous>, transform_indices = @transform_3, window_bounds = array<i64: 32, 32>}, {pipeline_mode = #tpu.pipeline_mode<synchronous>, transform_indices = @transform_4, window_bounds = array<i64: 32, 1>}, {pipeline_mode = #tpu.pipeline_mode<synchronous>, transform_indices = @transform_5, window_bounds = array<i64: 32, 1>}, {pipeline_mode = #tpu.pipeline_mode<synchronous>, transform_indices = @transform_6, window_bounds = array<i64: 1, 1>}, {transform_indices = @transform_7, window_bounds = array<i64: 1, 384>}]} {
    %c0 = arith.constant 0 : index
    %c0_0 = arith.constant 0 : index
    %0 = vector.load %arg1[%c0, %c0_0] : memref<384x16xf32, #tpu.memory_space<vmem>>, vector<384x16xf32>
    %c0_1 = arith.constant 0 : index
    %c0_2 = arith.constant 0 : index
    %1 = vector.load %arg2[%c0_1, %c0_2] : memref<32x16xf32, #tpu.memory_space<vmem>>, vector<32x16xf32>
    %c0_3 = arith.constant 0 : index
    %c0_4 = arith.constant 0 : index
    %2 = vector.load %arg3[%c0_3, %c0_4] : memref<32x1xf32, #tpu.memory_space<vmem>>, vector<32x1xf32>
    %cst = arith.constant dense<0.000000e+00> : vector<32x384xf32>
    %3 = tpu.matmul %1, %0, %cst {dimension_numbers = #tpu.dot_dimension_numbers<[1], [1], [0], [0], [0, 0, 1, 0], [], []>} : vector<32x16xf32>, vector<384x16xf32>, vector<32x384xf32> -> vector<32x384xf32>
    %4 = vector.broadcast %2 : vector<32x1xf32> to vector<32x384xf32>
    %5 = arith.addf %3, %4 : vector<32x384xf32>
    %cst_5 = arith.constant 5.000000e-01 : f32
    %6 = vector.broadcast %cst_5 : f32 to vector<32x384xf32>
    %7 = arith.mulf %6, %5 : vector<32x384xf32>
    %8 = math.tanh %7 : vector<32x384xf32>
    %cst_6 = arith.constant 5.000000e-01 : f32
    %9 = vector.broadcast %cst_6 : f32 to vector<32x384xf32>
    %10 = arith.mulf %9, %8 : vector<32x384xf32>
    %cst_7 = arith.constant 5.000000e-01 : f32
    %11 = vector.broadcast %cst_7 : f32 to vector<32x384xf32>
    %12 = arith.addf %10, %11 : vector<32x384xf32>
    %c0_8 = arith.constant 0 : index
    %c0_9 = arith.constant 0 : index
    %13 = vector.load %arg4[%c0_8, %c0_9] : memref<32x32xf32, #tpu.memory_space<vmem>>, vector<32x32xf32>
    %c0_10 = arith.constant 0 : index
    %c0_11 = arith.constant 0 : index
    %14 = vector.load %arg5[%c0_10, %c0_11] : memref<32x1xf32, #tpu.memory_space<vmem>>, vector<32x1xf32>
    %cst_12 = arith.constant dense<0.000000e+00> : vector<32x384xf32>
    %15 = tpu.matmul %13, %12, %cst_12 {dimension_numbers = #tpu.dot_dimension_numbers<[1], [0], [0], [1], [0, 0, 1, 1], [], []>} : vector<32x32xf32>, vector<32x384xf32>, vector<32x384xf32> -> vector<32x384xf32>
    %16 = vector.broadcast %14 : vector<32x1xf32> to vector<32x384xf32>
    %17 = arith.addf %15, %16 : vector<32x384xf32>
    %cst_13 = arith.constant 5.000000e-01 : f32
    %18 = vector.broadcast %cst_13 : f32 to vector<32x384xf32>
    %19 = arith.mulf %18, %17 : vector<32x384xf32>
    %20 = math.tanh %19 : vector<32x384xf32>
    %cst_14 = arith.constant 5.000000e-01 : f32
    %21 = vector.broadcast %cst_14 : f32 to vector<32x384xf32>
    %22 = arith.mulf %21, %20 : vector<32x384xf32>
    %cst_15 = arith.constant 5.000000e-01 : f32
    %23 = vector.broadcast %cst_15 : f32 to vector<32x384xf32>
    %24 = arith.addf %22, %23 : vector<32x384xf32>
    %c0_16 = arith.constant 0 : index
    %c0_17 = arith.constant 0 : index
    %25 = vector.load %arg6[%c0_16, %c0_17] : memref<32x1xf32, #tpu.memory_space<vmem>>, vector<32x1xf32>
    %c0_18 = arith.constant 0 : index
    %c0_19 = arith.constant 0 : index
    %26 = vector.load %arg7[%c0_18, %c0_19] : memref<1x1xf32, #tpu.memory_space<vmem>>, vector<1x1xf32>
    %27 = vector.broadcast %25 : vector<32x1xf32> to vector<32x384xf32>
    %28 = arith.mulf %24, %27 : vector<32x384xf32>
    %cst_20 = arith.constant dense<0.000000e+00> : vector<384xf32>
    %29 = vector.multi_reduction <add>, %28, %cst_20 [0] : vector<32x384xf32> to vector<384xf32>
    %30 = vector.shape_cast %29 : vector<384xf32> to vector<1x384xf32>
    %31 = vector.broadcast %26 : vector<1x1xf32> to vector<1x384xf32>
    %32 = arith.addf %30, %31 : vector<1x384xf32>
    %c0_21 = arith.constant 0 : index
    %c0_22 = arith.constant 0 : index
    %33 = vector.load %arg8[%c0_21, %c0_22] : memref<1x384xf32, #tpu.memory_space<vmem>>, vector<1x384xf32>
    tpu.vector_store %arg8[%c0_21, %c0_22], %32 {strides = array<i32>} : memref<1x384xf32, #tpu.memory_space<vmem>>, vector<1x384xf32>,
    return
  }
  func.func @transform_0(%arg0: i32) -> (i32, i32) {
    %c0_i32 = arith.constant 0 : i32
    %c0_i32_0 = arith.constant 0 : i32
    return %arg0, %c0_i32 : i32, i32
  }
  func.func @transform_1(%arg0: i32) -> (i32, i32) {
    %c0_i32 = arith.constant 0 : i32
    %c0_i32_0 = arith.constant 0 : i32
    %c0_i32_1 = arith.constant 0 : i32
    return %c0_i32, %c0_i32_0 : i32, i32
  }
  func.func @transform_2(%arg0: i32) -> (i32, i32) {
    %c0_i32 = arith.constant 0 : i32
    %c0_i32_0 = arith.constant 0 : i32
    %c0_i32_1 = arith.constant 0 : i32
    return %c0_i32, %c0_i32_0 : i32, i32
  }
  func.func @transform_3(%arg0: i32) -> (i32, i32) {
    %c0_i32 = arith.constant 0 : i32
    %c0_i32_0 = arith.constant 0 : i32
    %c0_i32_1 = arith.constant 0 : i32
    return %c0_i32, %c0_i32_0 : i32, i32
  }
  func.func @transform_4(%arg0: i32) -> (i32, i32) {
    %c0_i32 = arith.constant 0 : i32
    %c0_i32_0 = arith.constant 0 : i32
    %c0_i32_1 = arith.constant 0 : i32
    return %c0_i32, %c0_i32_0 : i32, i32
  }
  func.func @transform_5(%arg0: i32) -> (i32, i32) {
    %c0_i32 = arith.constant 0 : i32
    %c0_i32_0 = arith.constant 0 : i32
    %c0_i32_1 = arith.constant 0 : i32
    return %c0_i32, %c0_i32_0 : i32, i32
  }
  func.func @transform_6(%arg0: i32) -> (i32, i32) {
    %c0_i32 = arith.constant 0 : i32
    %c0_i32_0 = arith.constant 0 : i32
    %c0_i32_1 = arith.constant 0 : i32
    return %c0_i32, %c0_i32_0 : i32, i32
  }
  func.func @transform_7(%arg0: i32) -> (i32, i32) {
    %c0_i32 = arith.constant 0 : i32
    %c0_i32_0 = arith.constant 0 : i32
    return %c0_i32, %arg0 : i32, i32
  }
}

</mosaic_0001>

<llo_original>
// kernel: mlp_forward.1
$region0: #{mlp_forward.1}
  #allocation0 [shape = 'u32[]', space=smem, size = 0x4, offset = 0x4, fixed_abs, tag = 'smem constant byte address 0x4 - core index']
  #allocation1 [shape = 'u32[144,128]{1,0:T(1,128)}', space=vmem, size = 0x12000, scoped, tag = 'internal scratch']
  #allocation2 [shape = 'f32[1,1]{1,0:T(1,128)S(1)}', space=vmem, size = 0x200, scoped, tag = 'scoped memory for mlp_forward.1']
  %s0 = inlined_call_operand.vmem [shape: f32[384,16], index: 0, kind: input, shape index: {}]
  %s1 = inlined_call_operand.vmem [shape: f32[32,16], index: 1, kind: input, shape index: {}]
  %s2 = inlined_call_operand.vmem [shape: f32[32,1], index: 2, kind: input, shape index: {}]
  %s3 = inlined_call_operand.vmem [shape: f32[32,32], index: 3, kind: input, shape index: {}]
  %s4 = inlined_call_operand.vmem [shape: f32[32,1], index: 4, kind: input, shape index: {}]
  %s5 = inlined_call_operand.vmem [shape: f32[32,1], index: 5, kind: input, shape index: {}]
  %s6 = inlined_call_operand.<no memory space> [shape: f32[1,1], index: 6, kind: input, shape index: {}]
  %s7 = inlined_call_operand.vmem [shape: f32[1,384], index: 7, kind: output, shape index: {}]
  %s8 = sld [smem:[#allocation0]]
  $region38: #{mlp_forward.1} parent=0
    _
  %s10 = ssub.s32 1, %s8
  %s11 = scalar_select 0, %s10, %s8
  %v12 = vstv %s6
  %13 = vst [vmem:[#allocation2] sm:$0x1] %v12
  // Predicated region
  $region2: #{mlp_forward.1} parent=0 // pred_check
    _
  $region3: #{mlp_forward.1} parent=0 // pred_check_branch
    %15 = sbr.rel (0) target = $region5
  $region4: #{mlp_forward.1} parent=0 // pred_region
    _
  $region5: #{mlp_forward.1} parent=0 // pred_fallthru
    _
  // Predicated region
  $region6: #{mlp_forward.1} parent=0 // pred_check
    _
  $region7: #{mlp_forward.1} parent=0 // pred_check_branch
    %17 = sbr.rel (0) target = $region9
  $region8: #{mlp_forward.1} parent=0 // pred_region
    _
  $region9: #{mlp_forward.1} parent=0 // pred_fallthru
    _
  // Predicated region
  $region10: #{mlp_forward.1} parent=0 // pred_check
    _
  $region11: #{mlp_forward.1} parent=0 // pred_check_branch
    %19 = sbr.rel (0) target = $region13
  $region12: #{mlp_forward.1} parent=0 // pred_region
    _
  $region13: #{mlp_forward.1} parent=0 // pred_fallthru
    _
  // Predicated region
  $region14: #{mlp_forward.1} parent=0 // pred_check
    _
  $region15: #{mlp_forward.1} parent=0 // pred_check_branch
    %21 = sbr.rel (0) target = $region17
  $region16: #{mlp_forward.1} parent=0 // pred_region
    _
  $region17: #{mlp_forward.1} parent=0 // pred_fallthru
    _
  // Predicated region
  $region18: #{mlp_forward.1} parent=0 // pred_check
    _
  $region19: #{mlp_forward.1} parent=0 // pred_check_branch
    %23 = sbr.rel (0) target = $region21
  $region20: #{mlp_forward.1} parent=0 // pred_region
    _
  $region21: #{mlp_forward.1} parent=0 // pred_fallthru
    _
  // Predicated region
  $region22: #{mlp_forward.1} parent=0 // pred_check
    _
  $region23: #{mlp_forward.1} parent=0 // pred_check_branch
    %25 = sbr.rel (0) target = $region25
  $region24: #{mlp_forward.1} parent=0 // pred_region
    _
  $region25: #{mlp_forward.1} parent=0 // pred_fallthru
    _
  // Predicated region
  $region26: #{mlp_forward.1} parent=0 // pred_check
    _
  $region27: #{mlp_forward.1} parent=0 // pred_check_branch
    %27 = sbr.rel (0) target = $region29
  $region28: #{mlp_forward.1} parent=0 // pred_region
    _
  $region29: #{mlp_forward.1} parent=0 // pred_fallthru
    _
  %v28 = vld [vmem:[%s0] sm:$0xff]
  %v29 = vld [vmem:[%s0 + $0x8] sm:$0xff]
  %v30 = vld [vmem:[%s0 + $0x10] sm:$0xff]
  %v31 = vld [vmem:[%s0 + $0x18] sm:$0xff]
  %v32 = vld [vmem:[%s0 + $0x20] sm:$0xff]
  %v33 = vld [vmem:[%s0 + $0x28] sm:$0xff]
  %v34 = vld [vmem:[%s0 + $0x30] sm:$0xff]
  %v35 = vld [vmem:[%s0 + $0x38] sm:$0xff]
  %v36 = vld [vmem:[%s0 + $0x40] sm:$0xff]
  %v37 = vld [vmem:[%s0 + $0x48] sm:$0xff]
  %v38 = vld [vmem:[%s0 + $0x50] sm:$0xff]
  %v39 = vld [vmem:[%s0 + $0x58] sm:$0xff]
  %v40 = vld [vmem:[%s0 + $0x60] sm:$0xff]
  %v41 = vld [vmem:[%s0 + $0x68] sm:$0xff]
  %v42 = vld [vmem:[%s0 + $0x70] sm:$0xff]
  %v43 = vld [vmem:[%s0 + $0x78] sm:$0xff]
  %v44 = vld [vmem:[%s0 + $0x80] sm:$0xff]
  %v45 = vld [vmem:[%s0 + $0x88] sm:$0xff]
  %v46 = vld [vmem:[%s0 + $0x90] sm:$0xff]
  %v47 = vld [vmem:[%s0 + $0x98] sm:$0xff]
  %v48 = vld [vmem:[%s0 + $0xa0] sm:$0xff]
  %v49 = vld [vmem:[%s0 + $0xa8] sm:$0xff]
  %v50 = vld [vmem:[%s0 + $0xb0] sm:$0xff]
  %v51 = vld [vmem:[%s0 + $0xb8] sm:$0xff]
  %v52 = vld [vmem:[%s0 + $0xc0] sm:$0xff]
  %v53 = vld [vmem:[%s0 + $0xc8] sm:$0xff]
  %v54 = vld [vmem:[%s0 + $0xd0] sm:$0xff]
  %v55 = vld [vmem:[%s0 + $0xd8] sm:$0xff]
  %v56 = vld [vmem:[%s0 + $0xe0] sm:$0xff]
  %v57 = vld [vmem:[%s0 + $0xe8] sm:$0xff]
  %v58 = vld [vmem:[%s0 + $0xf0] sm:$0xff]
  %v59 = vld [vmem:[%s0 + $0xf8] sm:$0xff]
  %v60 = vld [vmem:[%s0 + $0x100] sm:$0xff]
  %v61 = vld [vmem:[%s0 + $0x108] sm:$0xff]
  %v62 = vld [vmem:[%s0 + $0x110] sm:$0xff]
  %v63 = vld [vmem:[%s0 + $0x118] sm:$0xff]
  %v64 = vld [vmem:[%s0 + $0x120] sm:$0xff]
  %v65 = vld [vmem:[%s0 + $0x128] sm:$0xff]
  %v66 = vld [vmem:[%s0 + $0x130] sm:$0xff]
  %v67 = vld [vmem:[%s0 + $0x138] sm:$0xff]
  %v68 = vld [vmem:[%s0 + $0x140] sm:$0xff]
  %v69 = vld [vmem:[%s0 + $0x148] sm:$0xff]
  %v70 = vld [vmem:[%s0 + $0x150] sm:$0xff]
  %v71 = vld [vmem:[%s0 + $0x158] sm:$0xff]
  %v72 = vld [vmem:[%s0 + $0x160] sm:$0xff]
  %v73 = vld [vmem:[%s0 + $0x168] sm:$0xff]
  %v74 = vld [vmem:[%s0 + $0x170] sm:$0xff]
  %v75 = vld [vmem:[%s0 + $0x178] sm:$0xff]
  %v76 = vld [vmem:[%s1] sm:$0xff]
  %v77 = vld [vmem:[%s1 + $0x8] sm:$0xff]
  %v78 = vld [vmem:[%s1 + $0x10] sm:$0xff]
  %v79 = vld [vmem:[%s1 + $0x18] sm:$0xff]
  %v80 = vld [vmem:[%s2] sm:$0xff]
  %v81 = vld [vmem:[%s2 + $0x8] sm:$0xff]
  %v82 = vld [vmem:[%s2 + $0x10] sm:$0xff]
  %v83 = vld [vmem:[%s2 + $0x18] sm:$0xff]
  %85 = vset.pattern.permute.xlu0 0
  %86 = vperm.xlu0 %85, %v80
  %v87 = vpop.permute.xlu0 %86
  %90 = vset.pattern.permute.xlu0 0
  %91 = vperm.xlu0 %90, %v81
  %v92 = vpop.permute.xlu0 %91
  %95 = vset.pattern.permute.xlu0 0
  %96 = vperm.xlu0 %95, %v82
  %v97 = vpop.permute.xlu0 %96
  %100 = vset.pattern.permute.xlu0 0
  %101 = vperm.xlu0 %100, %v83
  %v102 = vpop.permute.xlu0 %101
  %vm104 = vcmask 130048
  %v106 = vsel %vm104, %v76, 0
  %v109 = vsel %vm104, %v77, 0
  %v112 = vsel %vm104, %v78, 0
  %v115 = vsel %vm104, %v79, 0
  %v118 = vsel %vm104, %v28, 0
  %v121 = vsel %vm104, %v29, 0
  %v124 = vsel %vm104, %v30, 0
  %v127 = vsel %vm104, %v31, 0
  %v130 = vsel %vm104, %v32, 0
  %v133 = vsel %vm104, %v33, 0
  %v136 = vsel %vm104, %v34, 0
  %v139 = vsel %vm104, %v35, 0
  %v142 = vsel %vm104, %v36, 0
  %v145 = vsel %vm104, %v37, 0
  %v148 = vsel %vm104, %v38, 0
  %v151 = vsel %vm104, %v39, 0
  %v154 = vsel %vm104, %v40, 0
  %v157 = vsel %vm104, %v41, 0
  %v160 = vsel %vm104, %v42, 0
  %v163 = vsel %vm104, %v43, 0
  %v166 = vsel %vm104, %v44, 0
  %v169 = vsel %vm104, %v45, 0
  %v172 = vsel %vm104, %v46, 0
  %v175 = vsel %vm104, %v47, 0
  %v178 = vsel %vm104, %v48, 0
  %v181 = vsel %vm104, %v49, 0
  %v184 = vsel %vm104, %v50, 0
  %v187 = vsel %vm104, %v51, 0
  %v190 = vsel %vm104, %v52, 0
  %v193 = vsel %vm104, %v53, 0
  %v196 = vsel %vm104, %v54, 0
  %v199 = vsel %vm104, %v55, 0
  %v202 = vsel %vm104, %v56, 0
  %v205 = vsel %vm104, %v57, 0
  %v208 = vsel %vm104, %v58, 0
  %v211 = vsel %vm104, %v59, 0
  %v214 = vsel %vm104, %v60, 0
  %v217 = vsel %vm104, %v61, 0
  %v220 = vsel %vm104, %v62, 0
  %v223 = vsel %vm104, %v63, 0
  %v226 = vsel %vm104, %v64, 0
  %v229 = vsel %vm104, %v65, 0
  %v232 = vsel %vm104, %v66, 0
  %v235 = vsel %vm104, %v67, 0
  %v238 = vsel %vm104, %v68, 0
  %v241 = vsel %vm104, %v69, 0
  %v244 = vsel %vm104, %v70, 0
  %v247 = vsel %vm104, %v71, 0
  %v250 = vsel %vm104, %v72, 0
  %v253 = vsel %vm104, %v73, 0
  %v256 = vsel %vm104, %v74, 0
  %v259 = vsel %vm104, %v75, 0
  %261 = vmatprep.subr.mxu0 0.0
  %262 = vmatpush1.xpose.msra.mxu0 %v118
  %263 = vmatprep.subr.mxu0 0.0
  %264 = vmatpush1.xpose.msra.mxu0 %v121
  %265 = vmatprep.subr.mxu0 0.0
  %266 = vmatpush1.xpose.msra.mxu0 %v124
  %267 = vmatprep.subr.mxu0 0.0
  %268 = vmatpush1.xpose.msra.mxu0 %v127
  %269 = vmatprep.subr.mxu0 0.0
  %270 = vmatpush1.xpose.msra.mxu0 %v130
  %271 = vmatprep.subr.mxu0 0.0
  %272 = vmatpush1.xpose.msra.mxu0 %v133
  %273 = vmatprep.subr.mxu0 0.0
  %274 = vmatpush1.xpose.msra.mxu0 %v136
  %275 = vmatprep.subr.mxu0 0.0
  %276 = vmatpush1.xpose.msra.mxu0 %v139
  %277 = vmatprep.subr.mxu0 0.0
  %278 = vmatpush1.xpose.msra.mxu0 %v142
  %279 = vmatprep.subr.mxu0 0.0
  %280 = vmatpush1.xpose.msra.mxu0 %v145
  %281 = vmatprep.subr.mxu0 0.0
  %282 = vmatpush1.xpose.msra.mxu0 %v148
  %283 = vmatprep.subr.mxu0 0.0
  %284 = vmatpush1.xpose.msra.mxu0 %v151
  %285 = vmatprep.subr.mxu0 0.0
  %286 = vmatpush1.xpose.msra.mxu0 %v154
  %287 = vmatprep.subr.mxu0 0.0
  %288 = vmatpush1.xpose.msra.mxu0 %v157
  %289 = vmatprep.subr.mxu0 0.0
  %290 = vmatpush1.xpose.msra.mxu0 %v160
  %291 = vmatprep.subr.mxu0 0.0
  %292 = vmatpush1.xpose.msra.mxu0 %v163
  %293 = vmatprep.subr.mxu0 0.0
  %294 = vmatpush1.xpose.msra.mxu0 %v166
  %295 = vmatprep.subr.mxu0 0.0
  %296 = vmatpush1.xpose.msra.mxu0 %v169
  %297 = vmatprep.subr.mxu0 0.0
  %298 = vmatpush1.xpose.msra.mxu0 %v172
  %299 = vmatprep.subr.mxu0 0.0
  %300 = vmatpush1.xpose.msra.mxu0 %v175
  %301 = vmatprep.subr.mxu0 0.0
  %302 = vmatpush1.xpose.msra.mxu0 %v178
  %303 = vmatprep.subr.mxu0 0.0
  %304 = vmatpush1.xpose.msra.mxu0 %v181
  %305 = vmatprep.subr.mxu0 0.0
  %306 = vmatpush1.xpose.msra.mxu0 %v184
  %307 = vmatprep.subr.mxu0 0.0
  %308 = vmatpush1.xpose.msra.mxu0 %v187
  %309 = vmatprep.subr.mxu0 0.0
  %310 = vmatpush1.xpose.msra.mxu0 %v190
  %311 = vmatprep.subr.mxu0 0.0
  %312 = vmatpush1.xpose.msra.mxu0 %v193
  %313 = vmatprep.subr.mxu0 0.0
  %314 = vmatpush1.xpose.msra.mxu0 %v196
  %315 = vmatprep.subr.mxu0 0.0
  %316 = vmatpush1.xpose.msra.mxu0 %v199
  %317 = vmatprep.subr.mxu0 0.0
  %318 = vmatpush1.xpose.msra.mxu0 %v202
  %319 = vmatprep.subr.mxu0 0.0
  %320 = vmatpush1.xpose.msra.mxu0 %v205
  %321 = vmatprep.subr.mxu0 0.0
  %322 = vmatpush1.xpose.msra.mxu0 %v208
  %323 = vmatprep.subr.mxu0 0.0
  %324 = vmatpush1.xpose.msra.mxu0 %v211
  %325 = vmatprep.mubr.f32.mxu0 0.0
  %326 = vmatmul.mubr.f32.gmra.mrb[0].mxu0 %v106
  %v327 = vpop.f32.mrb[0].mxu0
  %v328 = vadd.f32 %v87, %v327
  %v329 = vpop.f32.mrb[0].mxu0
  %v330 = vadd.f32 %v87, %v329
  %331 = vmatprep.mubr.f32.mxu0 0.0
  %332 = vmatmul.mubr.f32.gmra.mrb[0].mxu0 %v109
  %v333 = vpop.f32.mrb[0].mxu0
  %v334 = vadd.f32 %v92, %v333
  %v335 = vpop.f32.mrb[0].mxu0
  %v336 = vadd.f32 %v92, %v335
  %337 = vmatprep.mubr.f32.mxu0 0.0
  %338 = vmatmul.mubr.f32.gmra.mrb[0].mxu0 %v112
  %v339 = vpop.f32.mrb[0].mxu0
  %v340 = vadd.f32 %v97, %v339
  %v341 = vpop.f32.mrb[0].mxu0
  %v342 = vadd.f32 %v97, %v341
  %343 = vmatprep.mubr.f32.mxu0 0.0
  %344 = vmatmul.mubr.f32.gmra.mrb[0].mxu0 %v115
  %v345 = vpop.f32.mrb[0].mxu0
  %v346 = vadd.f32 %v102, %v345
  %v347 = vpop.f32.mrb[0].mxu0
  %v348 = vadd.f32 %v102, %v347
  %349 = vdwg.mxu0
  %350 = vmatprep.subr.mxu0 0.0
  %351 = vmatpush1.xpose.msra.mxu0 %v214
  %352 = vmatprep.subr.mxu0 0.0
  %353 = vmatpush1.xpose.msra.mxu0 %v217
  %354 = vmatprep.subr.mxu0 0.0
  %355 = vmatpush1.xpose.msra.mxu0 %v220
  %356 = vmatprep.subr.mxu0 0.0
  %357 = vmatpush1.xpose.msra.mxu0 %v223
  %358 = vmatprep.subr.mxu0 0.0
  %359 = vmatpush1.xpose.msra.mxu0 %v226
  %360 = vmatprep.subr.mxu0 0.0
  %361 = vmatpush1.xpose.msra.mxu0 %v229
  %362 = vmatprep.subr.mxu0 0.0
  %363 = vmatpush1.xpose.msra.mxu0 %v232
  %364 = vmatprep.subr.mxu0 0.0
  %365 = vmatpush1.xpose.msra.mxu0 %v235
  %366 = vmatprep.subr.mxu0 0.0
  %367 = vmatpush1.xpose.msra.mxu0 %v238
  %368 = vmatprep.subr.mxu0 0.0
  %369 = vmatpush1.xpose.msra.mxu0 %v241
  %370 = vmatprep.subr.mxu0 0.0
  %371 = vmatpush1.xpose.msra.mxu0 %v244
  %372 = vmatprep.subr.mxu0 0.0
  %373 = vmatpush1.xpose.msra.mxu0 %v247
  %374 = vmatprep.subr.mxu0 0.0
  %375 = vmatpush1.xpose.msra.mxu0 %v250
  %376 = vmatprep.subr.mxu0 0.0
  %377 = vmatpush1.xpose.msra.mxu0 %v253
  %378 = vmatprep.subr.mxu0 0.0
  %379 = vmatpush1.xpose.msra.mxu0 %v256
  %380 = vmatprep.subr.mxu0 0.0
  %381 = vmatpush1.xpose.msra.mxu0 %v259
  %382 = vmatprep.subr.mxu0 0.0
  %383 = vmatpush1.xpose.msra.mxu0 0.0
  %384 = vmatprep.subr.mxu0 0.0
  %385 = vmatpush1.xpose.msra.mxu0 0.0
  %386 = vmatprep.subr.mxu0 0.0
  %387 = vmatpush1.xpose.msra.mxu0 0.0
  %388 = vmatprep.subr.mxu0 0.0
  %389 = vmatpush1.xpose.msra.mxu0 0.0
  %390 = vmatprep.subr.mxu0 0.0
  %391 = vmatpush1.xpose.msra.mxu0 0.0
  %392 = vmatprep.subr.mxu0 0.0
  %393 = vmatpush1.xpose.msra.mxu0 0.0
  %394 = vmatprep.subr.mxu0 0.0
  %395 = vmatpush1.xpose.msra.mxu0 0.0
  %396 = vmatprep.subr.mxu0 0.0
  %397 = vmatpush1.xpose.msra.mxu0 0.0
  %398 = vmatprep.subr.mxu0 0.0
  %399 = vmatpush1.xpose.msra.mxu0 0.0
  %400 = vmatprep.subr.mxu0 0.0
  %401 = vmatpush1.xpose.msra.mxu0 0.0
  %402 = vmatprep.subr.mxu0 0.0
  %403 = vmatpush1.xpose.msra.mxu0 0.0
  %404 = vmatprep.subr.mxu0 0.0
  %405 = vmatpush1.xpose.msra.mxu0 0.0
  %406 = vmatprep.subr.mxu0 0.0
  %407 = vmatpush1.xpose.msra.mxu0 0.0
  %408 = vmatprep.subr.mxu0 0.0
  %409 = vmatpush1.xpose.msra.mxu0 0.0
  %410 = vmatprep.subr.mxu0 0.0
  %411 = vmatpush1.xpose.msra.mxu0 0.0
  %412 = vmatprep.subr.mxu0 0.0
  %413 = vmatpush1.xpose.msra.mxu0 0.0
  %414 = vmatprep.mubr.f32.mxu0 0.0
  %415 = vmatmul.mubr.f32.gmra.mrb[0].mxu0 %v106
  %v416 = vpop.f32.mrb[0].mxu0
  %v417 = vadd.f32 %v87, %v416
  %v418 = vpop.f32.mrb[0].mxu0
  %419 = vmatprep.mubr.f32.mxu0 0.0
  %420 = vmatmul.mubr.f32.gmra.mrb[0].mxu0 %v109
  %v421 = vpop.f32.mrb[0].mxu0
  %v422 = vadd.f32 %v92, %v421
  %v423 = vpop.f32.mrb[0].mxu0
  %424 = vmatprep.mubr.f32.mxu0 0.0
  %425 = vmatmul.mubr.f32.gmra.mrb[0].mxu0 %v112
  %v426 = vpop.f32.mrb[0].mxu0
  %v427 = vadd.f32 %v97, %v426
  %v428 = vpop.f32.mrb[0].mxu0
  %429 = vmatprep.mubr.f32.mxu0 0.0
  %430 = vmatmul.mubr.f32.gmra.mrb[0].mxu0 %v115
  %v431 = vpop.f32.mrb[0].mxu0
  %v432 = vadd.f32 %v102, %v431
  %v433 = vpop.f32.mrb[0].mxu0
  %434 = vdwg.mxu0
  %v435 = vmul.f32 %v328, 0.5
  %v436 = vmul.f32 %v330, 0.5
  %v437 = vmul.f32 %v417, 0.5
  %v438 = vmul.f32 %v334, 0.5
  %v439 = vmul.f32 %v336, 0.5
  %v440 = vmul.f32 %v422, 0.5
  %v441 = vmul.f32 %v340, 0.5
  %v442 = vmul.f32 %v342, 0.5
  %v443 = vmul.f32 %v427, 0.5
  %v444 = vmul.f32 %v346, 0.5
  %v445 = vmul.f32 %v348, 0.5
  %v446 = vmul.f32 %v432, 0.5
  %v447 = vtanh.pop %v435
  %v448 = vtanh.pop %v436
  %v449 = vtanh.pop %v437
  %v450 = vtanh.pop %v438
  %v451 = vtanh.pop %v439
  %v452 = vtanh.pop %v440
  %v453 = vtanh.pop %v441
  %v454 = vtanh.pop %v442
  %v455 = vtanh.pop %v443
  %v456 = vtanh.pop %v444
  %v457 = vtanh.pop %v445
  %v458 = vtanh.pop %v446
  %v459 = vmul.f32 %v447, 0.5
  %v460 = vmul.f32 %v448, 0.5
  %v461 = vmul.f32 %v449, 0.5
  %v462 = vmul.f32 %v450, 0.5
  %v463 = vmul.f32 %v451, 0.5
  %v464 = vmul.f32 %v452, 0.5
  %v465 = vmul.f32 %v453, 0.5
  %v466 = vmul.f32 %v454, 0.5
  %v467 = vmul.f32 %v455, 0.5
  %v468 = vmul.f32 %v456, 0.5
  %v469 = vmul.f32 %v457, 0.5
  %v470 = vmul.f32 %v458, 0.5
  %v471 = vadd.f32 %v459, 0.5
  %v472 = vadd.f32 %v460, 0.5
  %v473 = vadd.f32 %v461, 0.5
  %v474 = vadd.f32 %v462, 0.5
  %v475 = vadd.f32 %v463, 0.5
  %v476 = vadd.f32 %v464, 0.5
  %v477 = vadd.f32 %v465, 0.5
  %v478 = vadd.f32 %v466, 0.5
  %v479 = vadd.f32 %v467, 0.5
  %v480 = vadd.f32 %v468, 0.5
  %v481 = vadd.f32 %v469, 0.5
  %v482 = vadd.f32 %v470, 0.5
  %v483 = vld [vmem:[%s3] sm:$0xff]
  %v484 = vld [vmem:[%s3 + $0x8] sm:$0xff]
  %v485 = vld [vmem:[%s3 + $0x10] sm:$0xff]
  %v486 = vld [vmem:[%s3 + $0x18] sm:$0xff]
  %v487 = vld [vmem:[%s4] sm:$0xff]
  %v488 = vld [vmem:[%s4 + $0x8] sm:$0xff]
  %v489 = vld [vmem:[%s4 + $0x10] sm:$0xff]
  %v490 = vld [vmem:[%s4 + $0x18] sm:$0xff]
  %492 = vset.pattern.permute.xlu0 0
  %493 = vperm.xlu0 %492, %v487
  %v494 = vpop.permute.xlu0 %493
  %497 = vset.pattern.permute.xlu0 0
  %498 = vperm.xlu0 %497, %v488
  %v499 = vpop.permute.xlu0 %498
  %502 = vset.pattern.permute.xlu0 0
  %503 = vperm.xlu0 %502, %v489
  %v504 = vpop.permute.xlu0 %503
  %507 = vset.pattern.permute.xlu0 0
  %508 = vperm.xlu0 %507, %v490
  %v509 = vpop.permute.xlu0 %508
  %vm511 = vcmask 261120
  %v513 = vsel %vm511, %v483, 0
  %v516 = vsel %vm511, %v484, 0
  %v519 = vsel %vm511, %v485, 0
  %v522 = vsel %vm511, %v486, 0
  %524 = vmatprep.subr.mxu0 %v472
  %525 = vmatpush1.msra.mxu0 %v471
  %526 = vmatprep.subr.mxu0 %v475
  %527 = vmatpush1.msra.mxu0 %v474
  %528 = vmatprep.subr.mxu0 %v478
  %529 = vmatpush1.msra.mxu0 %v477
  %530 = vmatprep.subr.mxu0 %v481
  %531 = vmatpush1.msra.mxu0 %v480
  %532 = vmatprep.subr.mxu0 0.0
  %533 = vmatpush1.msra.mxu0 0.0
  %534 = vmatprep.subr.mxu0 0.0
  %535 = vmatpush1.msra.mxu0 0.0
  %536 = vmatprep.subr.mxu0 0.0
  %537 = vmatpush1.msra.mxu0 0.0
  %538 = vmatprep.subr.mxu0 0.0
  %539 = vmatpush1.msra.mxu0 0.0
  %540 = vmatprep.subr.mxu0 0.0
  %541 = vmatpush1.msra.mxu0 0.0
  %542 = vmatprep.subr.mxu0 0.0
  %543 = vmatpush1.msra.mxu0 0.0
  %544 = vmatprep.subr.mxu0 0.0
  %545 = vmatpush1.msra.mxu0 0.0
  %546 = vmatprep.subr.mxu0 0.0
  %547 = vmatpush1.msra.mxu0 0.0
  %548 = vmatprep.subr.mxu0 0.0
  %549 = vmatpush1.msra.mxu0 0.0
  %550 = vmatprep.subr.mxu0 0.0
  %551 = vmatpush1.msra.mxu0 0.0
  %552 = vmatprep.subr.mxu0 0.0
  %553 = vmatpush1.msra.mxu0 0.0
  %554 = vmatprep.subr.mxu0 0.0
  %555 = vmatpush1.msra.mxu0 0.0
  %556 = vmatprep.subr.mxu0 0.0
  %557 = vmatpush1.msra.mxu0 0.0
  %558 = vmatprep.subr.mxu0 0.0
  %559 = vmatpush1.msra.mxu0 0.0
  %560 = vmatprep.subr.mxu0 0.0
  %561 = vmatpush1.msra.mxu0 0.0
  %562 = vmatprep.subr.mxu0 0.0
  %563 = vmatpush1.msra.mxu0 0.0
  %564 = vmatprep.subr.mxu0 0.0
  %565 = vmatpush1.msra.mxu0 0.0
  %566 = vmatprep.subr.mxu0 0.0
  %567 = vmatpush1.msra.mxu0 0.0
  %568 = vmatprep.subr.mxu0 0.0
  %569 = vmatpush1.msra.mxu0 0.0
  %570 = vmatprep.subr.mxu0 0.0
  %571 = vmatpush1.msra.mxu0 0.0
  %572 = vmatprep.subr.mxu0 0.0
  %573 = vmatpush1.msra.mxu0 0.0
  %574 = vmatprep.subr.mxu0 0.0
  %575 = vmatpush1.msra.mxu0 0.0
  %576 = vmatprep.subr.mxu0 0.0
  %577 = vmatpush1.msra.mxu0 0.0
  %578 = vmatprep.subr.mxu0 0.0
  %579 = vmatpush1.msra.mxu0 0.0
  %580 = vmatprep.subr.mxu0 0.0
  %581 = vmatpush1.msra.mxu0 0.0
  %582 = vmatprep.subr.mxu0 0.0
  %583 = vmatpush1.msra.mxu0 0.0
  %584 = vmatprep.subr.mxu0 0.0
  %585 = vmatpush1.msra.mxu0 0.0
  %586 = vmatprep.subr.mxu0 0.0
  %587 = vmatpush1.msra.mxu0 0.0
  %588 = vmatprep.mubr.f32.mxu0 0.0
  %589 = vmatmul.mubr.f32.gmra.mrb[0].mxu0 %v513
  %v590 = vpop.f32.mrb[0].mxu0
  %v591 = vadd.f32 %v494, %v590
  %v592 = vpop.f32.mrb[0].mxu0
  %v593 = vadd.f32 %v494, %v592
  %594 = vmatprep.mubr.f32.mxu0 0.0
  %595 = vmatmul.mubr.f32.gmra.mrb[0].mxu0 %v516
  %v596 = vpop.f32.mrb[0].mxu0
  %v597 = vadd.f32 %v499, %v596
  %v598 = vpop.f32.mrb[0].mxu0
  %v599 = vadd.f32 %v499, %v598
  %600 = vmatprep.mubr.f32.mxu0 0.0
  %601 = vmatmul.mubr.f32.gmra.mrb[0].mxu0 %v519
  %v602 = vpop.f32.mrb[0].mxu0
  %v603 = vadd.f32 %v504, %v602
  %v604 = vpop.f32.mrb[0].mxu0
  %v605 = vadd.f32 %v504, %v604
  %606 = vmatprep.mubr.f32.mxu0 0.0
  %607 = vmatmul.mubr.f32.gmra.mrb[0].mxu0 %v522
  %v608 = vpop.f32.mrb[0].mxu0
  %v609 = vadd.f32 %v509, %v608
  %v610 = vpop.f32.mrb[0].mxu0
  %v611 = vadd.f32 %v509, %v610
  %612 = vdwg.mxu0
  %613 = vmatprep.subr.mxu0 0.0
  %614 = vmatpush1.msra.mxu0 %v473
  %615 = vmatprep.subr.mxu0 0.0
  %616 = vmatpush1.msra.mxu0 %v476
  %617 = vmatprep.subr.mxu0 0.0
  %618 = vmatpush1.msra.mxu0 %v479
  %619 = vmatprep.subr.mxu0 0.0
  %620 = vmatpush1.msra.mxu0 %v482
  %621 = vmatprep.subr.mxu0 0.0
  %622 = vmatpush1.msra.mxu0 0.0
  %623 = vmatprep.subr.mxu0 0.0
  %624 = vmatpush1.msra.mxu0 0.0
  %625 = vmatprep.subr.mxu0 0.0
  %626 = vmatpush1.msra.mxu0 0.0
  %627 = vmatprep.subr.mxu0 0.0
  %628 = vmatpush1.msra.mxu0 0.0
  %629 = vmatprep.subr.mxu0 0.0
  %630 = vmatpush1.msra.mxu0 0.0
  %631 = vmatprep.subr.mxu0 0.0
  %632 = vmatpush1.msra.mxu0 0.0
  %633 = vmatprep.subr.mxu0 0.0
  %634 = vmatpush1.msra.mxu0 0.0
  %635 = vmatprep.subr.mxu0 0.0
  %636 = vmatpush1.msra.mxu0 0.0
  %637 = vmatprep.subr.mxu0 0.0
  %638 = vmatpush1.msra.mxu0 0.0
  %639 = vmatprep.subr.mxu0 0.0
  %640 = vmatpush1.msra.mxu0 0.0
  %641 = vmatprep.subr.mxu0 0.0
  %642 = vmatpush1.msra.mxu0 0.0
  %643 = vmatprep.subr.mxu0 0.0
  %644 = vmatpush1.msra.mxu0 0.0
  %645 = vmatprep.subr.mxu0 0.0
  %646 = vmatpush1.msra.mxu0 0.0
  %647 = vmatprep.subr.mxu0 0.0
  %648 = vmatpush1.msra.mxu0 0.0
  %649 = vmatprep.subr.mxu0 0.0
  %650 = vmatpush1.msra.mxu0 0.0
  %651 = vmatprep.subr.mxu0 0.0
  %652 = vmatpush1.msra.mxu0 0.0
  %653 = vmatprep.subr.mxu0 0.0
  %654 = vmatpush1.msra.mxu0 0.0
  %655 = vmatprep.subr.mxu0 0.0
  %656 = vmatpush1.msra.mxu0 0.0
  %657 = vmatprep.subr.mxu0 0.0
  %658 = vmatpush1.msra.mxu0 0.0
  %659 = vmatprep.subr.mxu0 0.0
  %660 = vmatpush1.msra.mxu0 0.0
  %661 = vmatprep.subr.mxu0 0.0
  %662 = vmatpush1.msra.mxu0 0.0
  %663 = vmatprep.subr.mxu0 0.0
  %664 = vmatpush1.msra.mxu0 0.0
  %665 = vmatprep.subr.mxu0 0.0
  %666 = vmatpush1.msra.mxu0 0.0
  %667 = vmatprep.subr.mxu0 0.0
  %668 = vmatpush1.msra.mxu0 0.0
  %669 = vmatprep.subr.mxu0 0.0
  %670 = vmatpush1.msra.mxu0 0.0
  %671 = vmatprep.subr.mxu0 0.0
  %672 = vmatpush1.msra.mxu0 0.0
  %673 = vmatprep.subr.mxu0 0.0
  %674 = vmatpush1.msra.mxu0 0.0
  %675 = vmatprep.subr.mxu0 0.0
  %676 = vmatpush1.msra.mxu0 0.0
  %677 = vmatprep.mubr.f32.mxu0 0.0
  %678 = vmatmul.mubr.f32.gmra.mrb[0].mxu0 %v513
  %v679 = vpop.f32.mrb[0].mxu0
  %v680 = vadd.f32 %v494, %v679
  %v681 = vpop.f32.mrb[0].mxu0
  %682 = vmatprep.mubr.f32.mxu0 0.0
  %683 = vmatmul.mubr.f32.gmra.mrb[0].mxu0 %v516
  %v684 = vpop.f32.mrb[0].mxu0
  %v685 = vadd.f32 %v499, %v684
  %v686 = vpop.f32.mrb[0].mxu0
  %687 = vmatprep.mubr.f32.mxu0 0.0
  %688 = vmatmul.mubr.f32.gmra.mrb[0].mxu0 %v519
  %v689 = vpop.f32.mrb[0].mxu0
  %v690 = vadd.f32 %v504, %v689
  %v691 = vpop.f32.mrb[0].mxu0
  %692 = vmatprep.mubr.f32.mxu0 0.0
  %693 = vmatmul.mubr.f32.gmra.mrb[0].mxu0 %v522
  %v694 = vpop.f32.mrb[0].mxu0
  %v695 = vadd.f32 %v509, %v694
  %v696 = vpop.f32.mrb[0].mxu0
  %697 = vdwg.mxu0
  %v698 = vmul.f32 %v591, 0.5
  %v699 = vmul.f32 %v593, 0.5
  %v700 = vmul.f32 %v680, 0.5
  %v701 = vmul.f32 %v597, 0.5
  %v702 = vmul.f32 %v599, 0.5
  %v703 = vmul.f32 %v685, 0.5
  %v704 = vmul.f32 %v603, 0.5
  %v705 = vmul.f32 %v605, 0.5
  %v706 = vmul.f32 %v690, 0.5
  %v707 = vmul.f32 %v609, 0.5
  %v708 = vmul.f32 %v611, 0.5
  %v709 = vmul.f32 %v695, 0.5
  %v710 = vtanh.pop %v698
  %v711 = vtanh.pop %v699
  %v712 = vtanh.pop %v700
  %v713 = vtanh.pop %v701
  %v714 = vtanh.pop %v702
  %v715 = vtanh.pop %v703
  %v716 = vtanh.pop %v704
  %v717 = vtanh.pop %v705
  %v718 = vtanh.pop %v706
  %v719 = vtanh.pop %v707
  %v720 = vtanh.pop %v708
  %v721 = vtanh.pop %v709
  %v722 = vmul.f32 %v710, 0.5
  %v723 = vmul.f32 %v711, 0.5
  %v724 = vmul.f32 %v712, 0.5
  %v725 = vmul.f32 %v713, 0.5
  %v726 = vmul.f32 %v714, 0.5
  %v727 = vmul.f32 %v715, 0.5
  %v728 = vmul.f32 %v716, 0.5
  %v729 = vmul.f32 %v717, 0.5
  %v730 = vmul.f32 %v718, 0.5
  %v731 = vmul.f32 %v719, 0.5
  %v732 = vmul.f32 %v720, 0.5
  %v733 = vmul.f32 %v721, 0.5
  %v734 = vadd.f32 %v722, 0.5
  %v735 = vadd.f32 %v723, 0.5
  %v736 = vadd.f32 %v724, 0.5
  %v737 = vadd.f32 %v725, 0.5
  %v738 = vadd.f32 %v726, 0.5
  %v739 = vadd.f32 %v727, 0.5
  %v740 = vadd.f32 %v728, 0.5
  %v741 = vadd.f32 %v729, 0.5
  %v742 = vadd.f32 %v730, 0.5
  %v743 = vadd.f32 %v731, 0.5
  %v744 = vadd.f32 %v732, 0.5
  %v745 = vadd.f32 %v733, 0.5
  %v746 = vld [vmem:[%s5] sm:$0xff]
  %v747 = vld [vmem:[%s5 + $0x8] sm:$0xff]
  %v748 = vld [vmem:[%s5 + $0x10] sm:$0xff]
  %v749 = vld [vmem:[%s5 + $0x18] sm:$0xff]
  %v750 = vld [vmem:[#allocation2] sm:$0x1]
  %752 = vset.pattern.permute.xlu0 0
  %753 = vperm.xlu0 %752, %v746
  %v754 = vpop.permute.xlu0 %753
  %757 = vset.pattern.permute.xlu0 0
  %758 = vperm.xlu0 %757, %v747
  %v759 = vpop.permute.xlu0 %758
  %762 = vset.pattern.permute.xlu0 0
  %763 = vperm.xlu0 %762, %v748
  %v764 = vpop.permute.xlu0 %763
  %767 = vset.pattern.permute.xlu0 0
  %768 = vperm.xlu0 %767, %v749
  %v769 = vpop.permute.xlu0 %768
  %v771 = vmul.f32 %v734, %v754
  %v772 = vmul.f32 %v735, %v754
  %v773 = vmul.f32 %v736, %v754
  %v774 = vmul.f32 %v737, %v759
  %v775 = vmul.f32 %v738, %v759
  %v776 = vmul.f32 %v739, %v759
  %v777 = vmul.f32 %v740, %v764
  %v778 = vmul.f32 %v741, %v764
  %v779 = vmul.f32 %v742, %v764
  %v780 = vmul.f32 %v743, %v769
  %v781 = vmul.f32 %v744, %v769
  %v782 = vmul.f32 %v745, %v769
  %v783 = vadd.f32 %v771, %v774
  %v784 = vadd.f32 %v783, %v777
  %v785 = vadd.f32 %v784, %v780
  %v786 = vrot.slane %v785, 4
  %v787 = vadd.f32 %v785, %v786
  %v788 = vrot.slane %v787, 2
  %v789 = vadd.f32 %v787, %v788
  %v790 = vrot.slane %v789, 1
  %v791 = vadd.f32 %v789, %v790
  %v792 = vadd.f32 %v772, %v775
  %v793 = vadd.f32 %v792, %v778
  %v794 = vadd.f32 %v793, %v781
  %v795 = vrot.slane %v794, 4
  %v796 = vadd.f32 %v794, %v795
  %v797 = vrot.slane %v796, 2
  %v798 = vadd.f32 %v796, %v797
  %v799 = vrot.slane %v798, 1
  %v800 = vadd.f32 %v798, %v799
  %v801 = vadd.f32 %v773, %v776
  %v802 = vadd.f32 %v801, %v779
  %v803 = vadd.f32 %v802, %v782
  %v804 = vrot.slane %v803, 4
  %v805 = vadd.f32 %v803, %v804
  %v806 = vrot.slane %v805, 2
  %v807 = vadd.f32 %v805, %v806
  %v808 = vrot.slane %v807, 1
  %v809 = vadd.f32 %v807, %v808
  %811 = vset.pattern.permute.xlu0 0
  %812 = vperm.xlu0 %811, %v750
  %v813 = vpop.permute.xlu0 %812
  %v815 = vlaneseq
  %v816 = vshrl.u32 %v815, 7
  %v817 = vsub.s32 0, %v816
  %v818 = vrot.slane %v813, %v817
  %v819 = vadd.f32 %v791, %v818
  %v820 = vadd.f32 %v800, %v818
  %v821 = vadd.f32 %v809, %v818
  %v825 = vcombine.low %v819, %v820
  %v827 = vunpack.c.l.s4 1966171168
  %v828 = vunpack.c.0.s8 %v827
  %v829 = vlaneseq
  %v830 = vshrl.u32 %v829, 7
  %v831 = vsub.s32 %v828, %v830
  %v832 = vrot.slane %v825, %v831
  %v834 = vunpack.c.l.s4 1966171168
  %v835 = vunpack.c.0.s8 %v834
  %v836 = vlaneseq
  %v837 = vshrl.u32 %v836, 7
  %v838 = vsub.s32 %v835, %v837
  %v839 = vrot.slane %v821, %v838
  %v840 = vcombine.low %v832, %v839
  %v842 = vunpack.c.l.s4 1966171168
  %v843 = vunpack.c.0.s8 %v842
  %v844 = vlaneseq
  %v845 = vshrl.u32 %v844, 7
  %v846 = vsub.s32 %v843, %v845
  %v847 = vrot.slane %v840, %v846
  %v849 = vlaneseq
  %vm850 = vcmp.ge.s32.totalorder %v849, 0
  %vm851 = vcmp.lt.s32.totalorder %v849, 384
  %vm852 = vmand %vm850, %vm851
  %853 = vst.msk [vmem:[%s7] sm:$0x7] %vm852, %v847
  // Predicated region
  $region30: #{mlp_forward.1} parent=0 // pred_check
    _
  $region31: #{mlp_forward.1} parent=0 // pred_check_branch
    %855 = sbr.rel (0) target = $region33
  $region32: #{mlp_forward.1} parent=0 // pred_region
    _
  $region33: #{mlp_forward.1} parent=0 // pred_fallthru
    _
  // Predicated region
  $region34: #{mlp_forward.1} parent=0 // pred_check
    _
  $region35: #{mlp_forward.1} parent=0 // pred_check_branch
    %857 = sbr.rel (0) target = $region37
  $region36: #{mlp_forward.1} parent=0 // pred_region
    _
  $region37: #{mlp_forward.1} parent=0 // pred_fallthru
    _

</llo_original>
